<compile_context>
chip_gen: v6e
topology: v6e:2x2x1
jax: 0.10.0
libtpu: 0.0.40
codegen_flags: <defaults>
</compile_context>

<pallas_src>
import jax
import jax.numpy as jnp
from jax.experimental import pallas as pl
from jax.experimental.pallas import tpu as pltpu


def mlp_kernel(w1_ref, b1_ref, w2_ref, b2_ref, x_ref, o_ref):
    """One batch tile, sublane-packed lane-major layout.

    x_ref: (7, 8, TL) VMEM  -> o_ref: (2, 8, TL) VMEM.
    w1_ref (3, 7), b1_ref (3,), w2_ref (2, 3), b2_ref (2,) are SMEM scalars
    in torch nn.Linear layout (W is (out_features, in_features)).
    All vector math is full-(8, TL)-slab VPU work; no MXU, no XLU.
    """
    in_f = x_ref.shape[0]    # 7
    hid = w1_ref.shape[0]    # 3

    # Layer 1: h[j] = relu(b1[j] + sum_k w1[j, k] * x[k])   -- (8, TL) slabs
    h = []
    for j in range(hid):
        acc = w1_ref[j, 0] * x_ref[0] + b1_ref[j]
        for k in range(1, in_f):
            acc = acc + w1_ref[j, k] * x_ref[k]
        h.append(jnp.maximum(acc, 0.0))

    # Layer 2: two logits (out_features == 2)
    l0 = b2_ref[0] + w2_ref[0, 0] * h[0]
    l1 = b2_ref[1] + w2_ref[1, 0] * h[0]
    for k in range(1, hid):
        l0 = l0 + w2_ref[0, k] * h[k]
        l1 = l1 + w2_ref[1, k] * h[k]

    # Stable 2-class softmax with a single exp:
    #   d = l1 - l0, e = exp(-|d|) in (0, 1]  (never overflows)
    #   big = 1/(1+e) is the larger prob, small = e/(1+e) the smaller one.
    d = l1 - l0
    e = jnp.exp(-jnp.abs(d))
    big = 1.0 / (1.0 + e)
    small = e * big
    pos = d >= 0.0                      # True -> class 1 is the larger prob
    # Direct full-slab row stores (unmasked, lane-dense).
    o_ref[0] = jnp.where(pos, small, big).astype(o_ref.dtype)   # p(class 0)
    o_ref[1] = jnp.where(pos, big, small).astype(o_ref.dtype)   # p(class 1)


def mlp_forward_lane_major(x_fm, w1, b1, w2, b2, *, block_b=131072):
    """Lane-major entry point.

    x_fm: (7, B) float32, batch on the last (lane) axis.
    Returns (2, B) float32 softmax probabilities.
    """
    in_f, B = x_fm.shape
    hid, in_f_w = w1.shape
    out_f, hid_w = w2.shape
    assert in_f == in_f_w and hid == hid_w and out_f == 2

    x_fm = x_fm.astype(jnp.float32)

    # Sublane packing: (7, B) -> (7, 8, B/8).  This is a contiguous row-major
    # reshape (a free view, no HBM pass).  Pad B up to a multiple of 8 only if
    # needed (no-op for typical batch sizes).
    Bp = ((B + 7) // 8) * 8
    if Bp != B:
        x_fm = jnp.pad(x_fm, ((0, 0), (0, Bp - B)))
    lanes = Bp // 8
    x3 = x_fm.reshape(in_f, 8, lanes)

    # Lane tile: multiple of 128, ~block_b batch elements per tile, capped so
    # the grid has >= 2 tiles at large B (keeps both v7x TensorCores busy).
    # Default (block_b=128K -> 16K lanes): x tile ~3.5 MB, out tile ~1 MB,
    # ~10 MB double-buffered -> comfortably inside the 32 MiB VMEM limit.
    tl = max(128, (block_b // 8 // 128) * 128)
    tl = min(tl, ((pl.cdiv(lanes, 2) + 127) // 128) * 128)
    if lanes <= tl:
        tl = lanes                       # single full-array tile (no (8,128) rule)
    grid = (pl.cdiv(lanes, tl),)         # ragged last tile handled by Pallas

    grid_spec = pltpu.PrefetchScalarGridSpec(
        num_scalar_prefetch=0,
        grid=grid,
        in_specs=[
            pl.BlockSpec(memory_space=pltpu.MemorySpace.SMEM),   # w1 (3, 7)
            pl.BlockSpec(memory_space=pltpu.MemorySpace.SMEM),   # b1 (3,)
            pl.BlockSpec(memory_space=pltpu.MemorySpace.SMEM),   # w2 (2, 3)
            pl.BlockSpec(memory_space=pltpu.MemorySpace.SMEM),   # b2 (2,)
            pl.BlockSpec((in_f, 8, tl), lambda i: (0, 0, i)),    # x, sublane-packed
        ],
        out_specs=pl.BlockSpec((out_f, 8, tl), lambda i: (0, 0, i)),
    )

    out3 = pl.pallas_call(
        mlp_kernel,
        out_shape=jax.ShapeDtypeStruct((out_f, 8, lanes), jnp.float32),
        grid_spec=grid_spec,
        compiler_params=pltpu.CompilerParams(
            dimension_semantics=("parallel",),        # batch tiles across TCs (v7x)
            vmem_limit_bytes=32 * 1024 * 1024,        # actual use ~10 MB at default tile
        ),
    )(w1, b1, w2, b2, x3)

    # Free contiguous reshape back to (2, Bp); slice off any sublane padding.
    return out3.reshape(out_f, Bp)[:, :B]


def mlp_forward(x, w1, b1, w2, b2, **kwargs):
    """Torch-layout compat wrapper: x (B, 7) -> (B, 2) softmax probabilities.

    TODO(synk): x.T and the output .T are separate full HBM passes; feed
    mlp_forward_lane_major directly (or fuse into x's producer) in production.
    """
    out_fm = mlp_forward_lane_major(x.T, w1, b1, w2, b2, **kwargs)
    return out_fm.T


def init_params(key):
    """Deterministic init mimicking torch.nn.Linear (uniform +/- 1/sqrt(fan_in)).

    Torch layout: W is (out_features, in_features), b is (out_features,).
    """
    k1, k2, k3, k4 = jax.random.split(key, 4)
    in1, out1 = 7, 3
    in2, out2 = 3, 2
    bound1 = 1.0 / jnp.sqrt(in1)
    bound2 = 1.0 / jnp.sqrt(in2)
    w1 = jax.random.uniform(k1, (out1, in1), jnp.float32, -bound1, bound1)
    b1 = jax.random.uniform(k2, (out1,), jnp.float32, -bound1, bound1)
    w2 = jax.random.uniform(k3, (out2, in2), jnp.float32, -bound2, bound2)
    b2 = jax.random.uniform(k4, (out2,), jnp.float32, -bound2, bound2)
    return w1, b1, w2, b2


def reference_forward(x, w1, b1, w2, b2):
    h = jnp.maximum(x @ w1.T + b1, 0.0)
    logits = h @ w2.T + b2
    return jax.nn.softmax(logits, axis=1)


def _check(x, w1, b1, w2, b2, **kwargs):
    out = jax.block_until_ready(mlp_forward(x, w1, b1, w2, b2, **kwargs))
    ref = reference_forward(x, w1, b1, w2, b2)
    assert out.shape == (x.shape[0], 2)
    assert jnp.allclose(out, ref, atol=1e-5, rtol=1e-5)
    assert jnp.allclose(jnp.sum(out, axis=1), jnp.ones((x.shape[0],)), atol=1e-5)
    return out


if __name__ == "__main__":
    key = jax.random.PRNGKey(0)
    k_params, k_x1, k_x2, k_x3, k_x4 = jax.random.split(key, 5)
    w1, b1, w2, b2 = init_params(k_params)

    # Small batch (like the module's default use): single full-array tile.
    x_small = jax.random.normal(k_x1, (8, 7), jnp.float32)
    _check(x_small, w1, b1, w2, b2)

    # Batch not divisible by 8: exercises the tiny sublane pad path.
    x_odd = jax.random.normal(k_x2, (13, 7), jnp.float32)
    _check(x_odd, w1, b1, w2, b2)

    # Medium batch: 1000 -> 125 lanes, still a single full-array tile.
    x_med = jax.random.normal(k_x3, (1000, 7), jnp.float32)
    _check(x_med, w1, b1, w2, b2)

    # Force a 2-tile grid (2048 batch, 256 lanes, 128-lane tiles) to exercise
    # the multi-tile / parallel-dimension path.
    x_big = jax.random.normal(k_x4, (2048, 7), jnp.float32)
    _check(x_big, w1, b1, w2, b2, block_b=1024)

    print("KERNEL_OK")
</pallas_src>

<mosaic_0001>
module attributes {stable_mosaic.version = 11 : i64} {
  func.func @mlp_kernel(%arg0: i32, %arg1: memref<3x7xf32, #tpu.memory_space<smem>>, %arg2: memref<3xf32, #tpu.memory_space<smem>>, %arg3: memref<2x3xf32, #tpu.memory_space<smem>>, %arg4: memref<2xf32, #tpu.memory_space<smem>>, %arg5: memref<7x8x1xf32, #tpu.memory_space<vmem>>, %arg6: memref<2x8x1xf32, #tpu.memory_space<vmem>>) attributes {dimension_semantics = [#tpu.dimension_semantics<parallel>], iteration_bounds = array<i64: 1>, scalar_prefetch = 0 : i64, scratch_operands = 0 : i64, tpu.core_type = #tpu.core_type<tc>, window_params = [{transform_indices = @transform_0, window_bounds = array<i64: 3, 7>}, {transform_indices = @transform_1, window_bounds = array<i64: 3>}, {transform_indices = @transform_2, window_bounds = array<i64: 2, 3>}, {transform_indices = @transform_3, window_bounds = array<i64: 2>}, {transform_indices = @transform_4, window_bounds = array<i64: 7, 8, 1>}, {transform_indices = @transform_5, window_bounds = array<i64: 2, 8, 1>}]} {
    %c0 = arith.constant 0 : index
    %c0_0 = arith.constant 0 : index
    %0 = memref.load %arg1[%c0, %c0_0] : memref<3x7xf32, #tpu.memory_space<smem>>
    %c0_1 = arith.constant 0 : index
    %c0_2 = arith.constant 0 : index
    %c0_3 = arith.constant 0 : index
    %1 = vector.load %arg5[%c0_1, %c0_2, %c0_3] : memref<7x8x1xf32, #tpu.memory_space<vmem>>, vector<1x8x1xf32>
    %2 = vector.shape_cast %1 : vector<1x8x1xf32> to vector<8x1xf32>
    %3 = vector.broadcast %0 : f32 to vector<8x1xf32>
    %4 = arith.mulf %3, %2 : vector<8x1xf32>
    %c0_4 = arith.constant 0 : index
    %5 = memref.load %arg2[%c0_4] : memref<3xf32, #tpu.memory_space<smem>>
    %6 = vector.broadcast %5 : f32 to vector<8x1xf32>
    %7 = arith.addf %4, %6 : vector<8x1xf32>
    %c0_5 = arith.constant 0 : index
    %c1 = arith.constant 1 : index
    %8 = memref.load %arg1[%c0_5, %c1] : memref<3x7xf32, #tpu.memory_space<smem>>
    %c1_6 = arith.constant 1 : index
    %c0_7 = arith.constant 0 : index
    %c0_8 = arith.constant 0 : index
    %9 = vector.load %arg5[%c1_6, %c0_7, %c0_8] : memref<7x8x1xf32, #tpu.memory_space<vmem>>, vector<1x8x1xf32>
    %10 = vector.shape_cast %9 : vector<1x8x1xf32> to vector<8x1xf32>
    %11 = vector.broadcast %8 : f32 to vector<8x1xf32>
    %12 = arith.mulf %11, %10 : vector<8x1xf32>
    %13 = arith.addf %7, %12 : vector<8x1xf32>
    %c0_9 = arith.constant 0 : index
    %c2 = arith.constant 2 : index
    %14 = memref.load %arg1[%c0_9, %c2] : memref<3x7xf32, #tpu.memory_space<smem>>
    %c2_10 = arith.constant 2 : index
    %c0_11 = arith.constant 0 : index
    %c0_12 = arith.constant 0 : index
    %15 = vector.load %arg5[%c2_10, %c0_11, %c0_12] : memref<7x8x1xf32, #tpu.memory_space<vmem>>, vector<1x8x1xf32>
    %16 = vector.shape_cast %15 : vector<1x8x1xf32> to vector<8x1xf32>
    %17 = vector.broadcast %14 : f32 to vector<8x1xf32>
    %18 = arith.mulf %17, %16 : vector<8x1xf32>
    %19 = arith.addf %13, %18 : vector<8x1xf32>
    %c0_13 = arith.constant 0 : index
    %c3 = arith.constant 3 : index
    %20 = memref.load %arg1[%c0_13, %c3] : memref<3x7xf32, #tpu.memory_space<smem>>
    %c3_14 = arith.constant 3 : index
    %c0_15 = arith.constant 0 : index
    %c0_16 = arith.constant 0 : index
    %21 = vector.load %arg5[%c3_14, %c0_15, %c0_16] : memref<7x8x1xf32, #tpu.memory_space<vmem>>, vector<1x8x1xf32>
    %22 = vector.shape_cast %21 : vector<1x8x1xf32> to vector<8x1xf32>
    %23 = vector.broadcast %20 : f32 to vector<8x1xf32>
    %24 = arith.mulf %23, %22 : vector<8x1xf32>
    %25 = arith.addf %19, %24 : vector<8x1xf32>
    %c0_17 = arith.constant 0 : index
    %c4 = arith.constant 4 : index
    %26 = memref.load %arg1[%c0_17, %c4] : memref<3x7xf32, #tpu.memory_space<smem>>
    %c4_18 = arith.constant 4 : index
    %c0_19 = arith.constant 0 : index
    %c0_20 = arith.constant 0 : index
    %27 = vector.load %arg5[%c4_18, %c0_19, %c0_20] : memref<7x8x1xf32, #tpu.memory_space<vmem>>, vector<1x8x1xf32>
    %28 = vector.shape_cast %27 : vector<1x8x1xf32> to vector<8x1xf32>
    %29 = vector.broadcast %26 : f32 to vector<8x1xf32>
    %30 = arith.mulf %29, %28 : vector<8x1xf32>
    %31 = arith.addf %25, %30 : vector<8x1xf32>
    %c0_21 = arith.constant 0 : index
    %c5 = arith.constant 5 : index
    %32 = memref.load %arg1[%c0_21, %c5] : memref<3x7xf32, #tpu.memory_space<smem>>
    %c5_22 = arith.constant 5 : index
    %c0_23 = arith.constant 0 : index
    %c0_24 = arith.constant 0 : index
    %33 = vector.load %arg5[%c5_22, %c0_23, %c0_24] : memref<7x8x1xf32, #tpu.memory_space<vmem>>, vector<1x8x1xf32>
    %34 = vector.shape_cast %33 : vector<1x8x1xf32> to vector<8x1xf32>
    %35 = vector.broadcast %32 : f32 to vector<8x1xf32>
    %36 = arith.mulf %35, %34 : vector<8x1xf32>
    %37 = arith.addf %31, %36 : vector<8x1xf32>
    %c0_25 = arith.constant 0 : index
    %c6 = arith.constant 6 : index
    %38 = memref.load %arg1[%c0_25, %c6] : memref<3x7xf32, #tpu.memory_space<smem>>
    %c6_26 = arith.constant 6 : index
    %c0_27 = arith.constant 0 : index
    %c0_28 = arith.constant 0 : index
    %39 = vector.load %arg5[%c6_26, %c0_27, %c0_28] : memref<7x8x1xf32, #tpu.memory_space<vmem>>, vector<1x8x1xf32>
    %40 = vector.shape_cast %39 : vector<1x8x1xf32> to vector<8x1xf32>
    %41 = vector.broadcast %38 : f32 to vector<8x1xf32>
    %42 = arith.mulf %41, %40 : vector<8x1xf32>
    %43 = arith.addf %37, %42 : vector<8x1xf32>
    %cst = arith.constant 0.000000e+00 : f32
    %44 = vector.broadcast %cst : f32 to vector<8x1xf32>
    %45 = arith.maximumf %43, %44 : vector<8x1xf32>
    %c1_29 = arith.constant 1 : index
    %c0_30 = arith.constant 0 : index
    %46 = memref.load %arg1[%c1_29, %c0_30] : memref<3x7xf32, #tpu.memory_space<smem>>
    %c0_31 = arith.constant 0 : index
    %c0_32 = arith.constant 0 : index
    %c0_33 = arith.constant 0 : index
    %47 = vector.load %arg5[%c0_31, %c0_32, %c0_33] : memref<7x8x1xf32, #tpu.memory_space<vmem>>, vector<1x8x1xf32>
    %48 = vector.shape_cast %47 : vector<1x8x1xf32> to vector<8x1xf32>
    %49 = vector.broadcast %46 : f32 to vector<8x1xf32>
    %50 = arith.mulf %49, %48 : vector<8x1xf32>
    %c1_34 = arith.constant 1 : index
    %51 = memref.load %arg2[%c1_34] : memref<3xf32, #tpu.memory_space<smem>>
    %52 = vector.broadcast %51 : f32 to vector<8x1xf32>
    %53 = arith.addf %50, %52 : vector<8x1xf32>
    %c1_35 = arith.constant 1 : index
    %c1_36 = arith.constant 1 : index
    %54 = memref.load %arg1[%c1_35, %c1_36] : memref<3x7xf32, #tpu.memory_space<smem>>
    %c1_37 = arith.constant 1 : index
    %c0_38 = arith.constant 0 : index
    %c0_39 = arith.constant 0 : index
    %55 = vector.load %arg5[%c1_37, %c0_38, %c0_39] : memref<7x8x1xf32, #tpu.memory_space<vmem>>, vector<1x8x1xf32>
    %56 = vector.shape_cast %55 : vector<1x8x1xf32> to vector<8x1xf32>
    %57 = vector.broadcast %54 : f32 to vector<8x1xf32>
    %58 = arith.mulf %57, %56 : vector<8x1xf32>
    %59 = arith.addf %53, %58 : vector<8x1xf32>
    %c1_40 = arith.constant 1 : index
    %c2_41 = arith.constant 2 : index
    %60 = memref.load %arg1[%c1_40, %c2_41] : memref<3x7xf32, #tpu.memory_space<smem>>
    %c2_42 = arith.constant 2 : index
    %c0_43 = arith.constant 0 : index
    %c0_44 = arith.constant 0 : index
    %61 = vector.load %arg5[%c2_42, %c0_43, %c0_44] : memref<7x8x1xf32, #tpu.memory_space<vmem>>, vector<1x8x1xf32>
    %62 = vector.shape_cast %61 : vector<1x8x1xf32> to vector<8x1xf32>
    %63 = vector.broadcast %60 : f32 to vector<8x1xf32>
    %64 = arith.mulf %63, %62 : vector<8x1xf32>
    %65 = arith.addf %59, %64 : vector<8x1xf32>
    %c1_45 = arith.constant 1 : index
    %c3_46 = arith.constant 3 : index
    %66 = memref.load %arg1[%c1_45, %c3_46] : memref<3x7xf32, #tpu.memory_space<smem>>
    %c3_47 = arith.constant 3 : index
    %c0_48 = arith.constant 0 : index
    %c0_49 = arith.constant 0 : index
    %67 = vector.load %arg5[%c3_47, %c0_48, %c0_49] : memref<7x8x1xf32, #tpu.memory_space<vmem>>, vector<1x8x1xf32>
    %68 = vector.shape_cast %67 : vector<1x8x1xf32> to vector<8x1xf32>
    %69 = vector.broadcast %66 : f32 to vector<8x1xf32>
    %70 = arith.mulf %69, %68 : vector<8x1xf32>
    %71 = arith.addf %65, %70 : vector<8x1xf32>
    %c1_50 = arith.constant 1 : index
    %c4_51 = arith.constant 4 : index
    %72 = memref.load %arg1[%c1_50, %c4_51] : memref<3x7xf32, #tpu.memory_space<smem>>
    %c4_52 = arith.constant 4 : index
    %c0_53 = arith.constant 0 : index
    %c0_54 = arith.constant 0 : index
    %73 = vector.load %arg5[%c4_52, %c0_53, %c0_54] : memref<7x8x1xf32, #tpu.memory_space<vmem>>, vector<1x8x1xf32>
    %74 = vector.shape_cast %73 : vector<1x8x1xf32> to vector<8x1xf32>
    %75 = vector.broadcast %72 : f32 to vector<8x1xf32>
    %76 = arith.mulf %75, %74 : vector<8x1xf32>
    %77 = arith.addf %71, %76 : vector<8x1xf32>
    %c1_55 = arith.constant 1 : index
    %c5_56 = arith.constant 5 : index
    %78 = memref.load %arg1[%c1_55, %c5_56] : memref<3x7xf32, #tpu.memory_space<smem>>
    %c5_57 = arith.constant 5 : index
    %c0_58 = arith.constant 0 : index
    %c0_59 = arith.constant 0 : index
    %79 = vector.load %arg5[%c5_57, %c0_58, %c0_59] : memref<7x8x1xf32, #tpu.memory_space<vmem>>, vector<1x8x1xf32>
    %80 = vector.shape_cast %79 : vector<1x8x1xf32> to vector<8x1xf32>
    %81 = vector.broadcast %78 : f32 to vector<8x1xf32>
    %82 = arith.mulf %81, %80 : vector<8x1xf32>
    %83 = arith.addf %77, %82 : vector<8x1xf32>
    %c1_60 = arith.constant 1 : index
    %c6_61 = arith.constant 6 : index
    %84 = memref.load %arg1[%c1_60, %c6_61] : memref<3x7xf32, #tpu.memory_space<smem>>
    %c6_62 = arith.constant 6 : index
    %c0_63 = arith.constant 0 : index
    %c0_64 = arith.constant 0 : index
    %85 = vector.load %arg5[%c6_62, %c0_63, %c0_64] : memref<7x8x1xf32, #tpu.memory_space<vmem>>, vector<1x8x1xf32>
    %86 = vector.shape_cast %85 : vector<1x8x1xf32> to vector<8x1xf32>
    %87 = vector.broadcast %84 : f32 to vector<8x1xf32>
    %88 = arith.mulf %87, %86 : vector<8x1xf32>
    %89 = arith.addf %83, %88 : vector<8x1xf32>
    %cst_65 = arith.constant 0.000000e+00 : f32
    %90 = vector.broadcast %cst_65 : f32 to vector<8x1xf32>
    %91 = arith.maximumf %89, %90 : vector<8x1xf32>
    %c2_66 = arith.constant 2 : index
    %c0_67 = arith.constant 0 : index
    %92 = memref.load %arg1[%c2_66, %c0_67] : memref<3x7xf32, #tpu.memory_space<smem>>
    %c0_68 = arith.constant 0 : index
    %c0_69 = arith.constant 0 : index
    %c0_70 = arith.constant 0 : index
    %93 = vector.load %arg5[%c0_68, %c0_69, %c0_70] : memref<7x8x1xf32, #tpu.memory_space<vmem>>, vector<1x8x1xf32>
    %94 = vector.shape_cast %93 : vector<1x8x1xf32> to vector<8x1xf32>
    %95 = vector.broadcast %92 : f32 to vector<8x1xf32>
    %96 = arith.mulf %95, %94 : vector<8x1xf32>
    %c2_71 = arith.constant 2 : index
    %97 = memref.load %arg2[%c2_71] : memref<3xf32, #tpu.memory_space<smem>>
    %98 = vector.broadcast %97 : f32 to vector<8x1xf32>
    %99 = arith.addf %96, %98 : vector<8x1xf32>
    %c2_72 = arith.constant 2 : index
    %c1_73 = arith.constant 1 : index
    %100 = memref.load %arg1[%c2_72, %c1_73] : memref<3x7xf32, #tpu.memory_space<smem>>
    %c1_74 = arith.constant 1 : index
    %c0_75 = arith.constant 0 : index
    %c0_76 = arith.constant 0 : index
    %101 = vector.load %arg5[%c1_74, %c0_75, %c0_76] : memref<7x8x1xf32, #tpu.memory_space<vmem>>, vector<1x8x1xf32>
    %102 = vector.shape_cast %101 : vector<1x8x1xf32> to vector<8x1xf32>
    %103 = vector.broadcast %100 : f32 to vector<8x1xf32>
    %104 = arith.mulf %103, %102 : vector<8x1xf32>
    %105 = arith.addf %99, %104 : vector<8x1xf32>
    %c2_77 = arith.constant 2 : index
    %c2_78 = arith.constant 2 : index
    %106 = memref.load %arg1[%c2_77, %c2_78] : memref<3x7xf32, #tpu.memory_space<smem>>
    %c2_79 = arith.constant 2 : index
    %c0_80 = arith.constant 0 : index
    %c0_81 = arith.constant 0 : index
    %107 = vector.load %arg5[%c2_79, %c0_80, %c0_81] : memref<7x8x1xf32, #tpu.memory_space<vmem>>, vector<1x8x1xf32>
    %108 = vector.shape_cast %107 : vector<1x8x1xf32> to vector<8x1xf32>
    %109 = vector.broadcast %106 : f32 to vector<8x1xf32>
    %110 = arith.mulf %109, %108 : vector<8x1xf32>
    %111 = arith.addf %105, %110 : vector<8x1xf32>
    %c2_82 = arith.constant 2 : index
    %c3_83 = arith.constant 3 : index
    %112 = memref.load %arg1[%c2_82, %c3_83] : memref<3x7xf32, #tpu.memory_space<smem>>
    %c3_84 = arith.constant 3 : index
    %c0_85 = arith.constant 0 : index
    %c0_86 = arith.constant 0 : index
    %113 = vector.load %arg5[%c3_84, %c0_85, %c0_86] : memref<7x8x1xf32, #tpu.memory_space<vmem>>, vector<1x8x1xf32>
    %114 = vector.shape_cast %113 : vector<1x8x1xf32> to vector<8x1xf32>
    %115 = vector.broadcast %112 : f32 to vector<8x1xf32>
    %116 = arith.mulf %115, %114 : vector<8x1xf32>
    %117 = arith.addf %111, %116 : vector<8x1xf32>
    %c2_87 = arith.constant 2 : index
    %c4_88 = arith.constant 4 : index
    %118 = memref.load %arg1[%c2_87, %c4_88] : memref<3x7xf32, #tpu.memory_space<smem>>
    %c4_89 = arith.constant 4 : index
    %c0_90 = arith.constant 0 : index
    %c0_91 = arith.constant 0 : index
    %119 = vector.load %arg5[%c4_89, %c0_90, %c0_91] : memref<7x8x1xf32, #tpu.memory_space<vmem>>, vector<1x8x1xf32>
    %120 = vector.shape_cast %119 : vector<1x8x1xf32> to vector<8x1xf32>
    %121 = vector.broadcast %118 : f32 to vector<8x1xf32>
    %122 = arith.mulf %121, %120 : vector<8x1xf32>
    %123 = arith.addf %117, %122 : vector<8x1xf32>
    %c2_92 = arith.constant 2 : index
    %c5_93 = arith.constant 5 : index
    %124 = memref.load %arg1[%c2_92, %c5_93] : memref<3x7xf32, #tpu.memory_space<smem>>
    %c5_94 = arith.constant 5 : index
    %c0_95 = arith.constant 0 : index
    %c0_96 = arith.constant 0 : index
    %125 = vector.load %arg5[%c5_94, %c0_95, %c0_96] : memref<7x8x1xf32, #tpu.memory_space<vmem>>, vector<1x8x1xf32>
    %126 = vector.shape_cast %125 : vector<1x8x1xf32> to vector<8x1xf32>
    %127 = vector.broadcast %124 : f32 to vector<8x1xf32>
    %128 = arith.mulf %127, %126 : vector<8x1xf32>
    %129 = arith.addf %123, %128 : vector<8x1xf32>
    %c2_97 = arith.constant 2 : index
    %c6_98 = arith.constant 6 : index
    %130 = memref.load %arg1[%c2_97, %c6_98] : memref<3x7xf32, #tpu.memory_space<smem>>
    %c6_99 = arith.constant 6 : index
    %c0_100 = arith.constant 0 : index
    %c0_101 = arith.constant 0 : index
    %131 = vector.load %arg5[%c6_99, %c0_100, %c0_101] : memref<7x8x1xf32, #tpu.memory_space<vmem>>, vector<1x8x1xf32>
    %132 = vector.shape_cast %131 : vector<1x8x1xf32> to vector<8x1xf32>
    %133 = vector.broadcast %130 : f32 to vector<8x1xf32>
    %134 = arith.mulf %133, %132 : vector<8x1xf32>
    %135 = arith.addf %129, %134 : vector<8x1xf32>
    %cst_102 = arith.constant 0.000000e+00 : f32
    %136 = vector.broadcast %cst_102 : f32 to vector<8x1xf32>
    %137 = arith.maximumf %135, %136 : vector<8x1xf32>
    %c0_103 = arith.constant 0 : index
    %138 = memref.load %arg4[%c0_103] : memref<2xf32, #tpu.memory_space<smem>>
    %c0_104 = arith.constant 0 : index
    %c0_105 = arith.constant 0 : index
    %139 = memref.load %arg3[%c0_104, %c0_105] : memref<2x3xf32, #tpu.memory_space<smem>>
    %140 = vector.broadcast %139 : f32 to vector<8x1xf32>
    %141 = arith.mulf %140, %45 : vector<8x1xf32>
    %142 = vector.broadcast %138 : f32 to vector<8x1xf32>
    %143 = arith.addf %142, %141 : vector<8x1xf32>
    %c1_106 = arith.constant 1 : index
    %144 = memref.load %arg4[%c1_106] : memref<2xf32, #tpu.memory_space<smem>>
    %c1_107 = arith.constant 1 : index
    %c0_108 = arith.constant 0 : index
    %145 = memref.load %arg3[%c1_107, %c0_108] : memref<2x3xf32, #tpu.memory_space<smem>>
    %146 = vector.broadcast %145 : f32 to vector<8x1xf32>
    %147 = arith.mulf %146, %45 : vector<8x1xf32>
    %148 = vector.broadcast %144 : f32 to vector<8x1xf32>
    %149 = arith.addf %148, %147 : vector<8x1xf32>
    %c0_109 = arith.constant 0 : index
    %c1_110 = arith.constant 1 : index
    %150 = memref.load %arg3[%c0_109, %c1_110] : memref<2x3xf32, #tpu.memory_space<smem>>
    %151 = vector.broadcast %150 : f32 to vector<8x1xf32>
    %152 = arith.mulf %151, %91 : vector<8x1xf32>
    %153 = arith.addf %143, %152 : vector<8x1xf32>
    %c1_111 = arith.constant 1 : index
    %c1_112 = arith.constant 1 : index
    %154 = memref.load %arg3[%c1_111, %c1_112] : memref<2x3xf32, #tpu.memory_space<smem>>
    %155 = vector.broadcast %154 : f32 to vector<8x1xf32>
    %156 = arith.mulf %155, %91 : vector<8x1xf32>
    %157 = arith.addf %149, %156 : vector<8x1xf32>
    %c0_113 = arith.constant 0 : index
    %c2_114 = arith.constant 2 : index
    %158 = memref.load %arg3[%c0_113, %c2_114] : memref<2x3xf32, #tpu.memory_space<smem>>
    %159 = vector.broadcast %158 : f32 to vector<8x1xf32>
    %160 = arith.mulf %159, %137 : vector<8x1xf32>
    %161 = arith.addf %153, %160 : vector<8x1xf32>
    %c1_115 = arith.constant 1 : index
    %c2_116 = arith.constant 2 : index
    %162 = memref.load %arg3[%c1_115, %c2_116] : memref<2x3xf32, #tpu.memory_space<smem>>
    %163 = vector.broadcast %162 : f32 to vector<8x1xf32>
    %164 = arith.mulf %163, %137 : vector<8x1xf32>
    %165 = arith.addf %157, %164 : vector<8x1xf32>
    %166 = arith.subf %165, %161 : vector<8x1xf32>
    %167 = math.absf %166 : vector<8x1xf32>
    %cst_117 = arith.constant 0.000000e+00 : f32
    %168 = vector.broadcast %cst_117 : f32 to vector<8x1xf32>
    %169 = arith.subf %168, %167 : vector<8x1xf32>
    %170 = math.exp %169 : vector<8x1xf32>
    %cst_118 = arith.constant 1.000000e+00 : f32
    %171 = vector.broadcast %cst_118 : f32 to vector<8x1xf32>
    %172 = arith.addf %171, %170 : vector<8x1xf32>
    %cst_119 = arith.constant 1.000000e+00 : f32
    %173 = vector.broadcast %cst_119 : f32 to vector<8x1xf32>
    %174 = arith.divf %173, %172 : vector<8x1xf32>
    %175 = arith.mulf %170, %174 : vector<8x1xf32>
    %cst_120 = arith.constant 0.000000e+00 : f32
    %176 = vector.broadcast %cst_120 : f32 to vector<8x1xf32>
    %177 = arith.cmpf oge, %166, %176 : vector<8x1xf32>
    %178 = arith.select %177, %175, %174 : vector<8x1xi1>, vector<8x1xf32>
    %c0_121 = arith.constant 0 : index
    %c0_122 = arith.constant 0 : index
    %c0_123 = arith.constant 0 : index
    %179 = vector.load %arg6[%c0_121, %c0_122, %c0_123] : memref<2x8x1xf32, #tpu.memory_space<vmem>>, vector<1x8x1xf32>
    %180 = vector.shape_cast %179 : vector<1x8x1xf32> to vector<8x1xf32>
    %181 = vector.shape_cast %178 : vector<8x1xf32> to vector<1x8x1xf32>
    tpu.vector_store %arg6[%c0_121, %c0_122, %c0_123], %181 {strides = array<i32>} : memref<2x8x1xf32, #tpu.memory_space<vmem>>, vector<1x8x1xf32>,
    %182 = arith.select %177, %174, %175 : vector<8x1xi1>, vector<8x1xf32>
    %c1_124 = arith.constant 1 : index
    %c0_125 = arith.constant 0 : index
    %c0_126 = arith.constant 0 : index
    %183 = vector.load %arg6[%c1_124, %c0_125, %c0_126] : memref<2x8x1xf32, #tpu.memory_space<vmem>>, vector<1x8x1xf32>
    %184 = vector.shape_cast %183 : vector<1x8x1xf32> to vector<8x1xf32>
    %185 = vector.shape_cast %182 : vector<8x1xf32> to vector<1x8x1xf32>
    tpu.vector_store %arg6[%c1_124, %c0_125, %c0_126], %185 {strides = array<i32>} : memref<2x8x1xf32, #tpu.memory_space<vmem>>, vector<1x8x1xf32>,
    return
  }
  func.func @transform_0(%arg0: i32) -> (i32, i32) {
    %c0_i32 = arith.constant 0 : i32
    %c0_i32_0 = arith.constant 0 : i32
    %c0_i32_1 = arith.constant 0 : i32
    return %c0_i32, %c0_i32_0 : i32, i32
  }
  func.func @transform_1(%arg0: i32) -> i32 {
    %c0_i32 = arith.constant 0 : i32
    %c0_i32_0 = arith.constant 0 : i32
    return %c0_i32 : i32
  }
  func.func @transform_2(%arg0: i32) -> (i32, i32) {
    %c0_i32 = arith.constant 0 : i32
    %c0_i32_0 = arith.constant 0 : i32
    %c0_i32_1 = arith.constant 0 : i32
    return %c0_i32, %c0_i32_0 : i32, i32
  }
  func.func @transform_3(%arg0: i32) -> i32 {
    %c0_i32 = arith.constant 0 : i32
    %c0_i32_0 = arith.constant 0 : i32
    return %c0_i32 : i32
  }
  func.func @transform_4(%arg0: i32) -> (i32, i32, i32) {
    %c0_i32 = arith.constant 0 : i32
    %c0_i32_0 = arith.constant 0 : i32
    %c0_i32_1 = arith.constant 0 : i32
    return %c0_i32, %c0_i32_0, %arg0 : i32, i32, i32
  }
  func.func @transform_5(%arg0: i32) -> (i32, i32, i32) {
    %c0_i32 = arith.constant 0 : i32
    %c0_i32_0 = arith.constant 0 : i32
    %c0_i32_1 = arith.constant 0 : i32
    return %c0_i32, %c0_i32_0, %arg0 : i32, i32, i32
  }
}

</mosaic_0001>

<llo_original>
// kernel: tpu_custom_call.1
$region0: #{tpu_custom_call.1}
  #allocation0 [shape = 'u32[]', space=smem, size = 0x4, offset = 0x4, fixed_abs, tag = 'smem constant byte address 0x4 - core index']
  #allocation1 [shape = 'u32[144,128]{1,0:T(1,128)}', space=vmem, size = 0x12000, scoped, tag = 'internal scratch']
  %s0 = inlined_call_operand.vmem [shape: f32[3,7], index: 0, kind: input, shape index: {}]
  %s1 = inlined_call_operand.vmem [shape: f32[3], index: 1, kind: input, shape index: {}]
  %s2 = inlined_call_operand.vmem [shape: f32[2,3], index: 2, kind: input, shape index: {}]
  %s3 = inlined_call_operand.vmem [shape: f32[2], index: 3, kind: input, shape index: {}]
  %s4 = inlined_call_operand.vmem [shape: f32[7,8,1], index: 4, kind: input, shape index: {}]
  %s5 = inlined_call_operand.vmem [shape: f32[2,8,1], index: 5, kind: output, shape index: {}]
  %s6 = sld [smem:[#allocation0]]
  $region46: #{tpu_custom_call.1} parent=0
    _
  %s8 = ssub.s32 1, %s6
  %s9 = scalar_select 0, %s8, %s6
  $region1: #{tpu_custom_call.1} parent=0
    #allocation2 [shape = 'u8[2048]{0}', space=smem, size = 0x800, scoped, tag = 'input window, operand 0, single buffered']
    #allocation3 [shape = 's32[1]{0}', space=sflag, size = 0x4, scoped, tag = 'scoped memory for tpu_custom_call.1']
    #allocation4 [shape = 'u8[512]{0}', space=smem, size = 0x200, scoped, tag = 'input window, operand 1, single buffered']
    #allocation5 [shape = 's32[1]{0}', space=sflag, size = 0x4, scoped, tag = 'scoped memory for tpu_custom_call.1']
    #allocation6 [shape = 'u8[1024]{0}', space=smem, size = 0x400, scoped, tag = 'input window, operand 2, single buffered']
    #allocation7 [shape = 'u8[512]{0}', space=smem, size = 0x200, scoped, tag = 'input window, operand 3, single buffered']
    #allocation8 [shape = 's32[1]{0}', space=sflag, size = 0x4, scoped, tag = 'scoped memory for tpu_custom_call.1']
    %10 = vsyncpa [#allocation3], 0
    %11 = vsyncpa [#allocation5], 0
    %12 = vsyncpa [#allocation8], 0
    // Predicated region
    $region2: #{tpu_custom_call.1} parent=1 // pred_check
      _
    $region3: #{tpu_custom_call.1} parent=1 // pred_check_branch
      %14 = sbr.rel (0) target = $region5
    $region4: #{tpu_custom_call.1} parent=1 // pred_region
      %s16 = ssub.s32 64, 64
      %17 = vsyncadd [#allocation3], %s16
      %s19 = sshll.u32 %s0, 4
      %s20 = int_to_ptr.vmem [resolvable:$true] %s19
      %22 = dma.vmem_to_smem %s20, 64, [#allocation2], [#allocation3]
    $region5: #{tpu_custom_call.1} parent=1 // pred_fallthru
      _
    // Predicated region
    $region6: #{tpu_custom_call.1} parent=1 // pred_check
      _
    $region7: #{tpu_custom_call.1} parent=1 // pred_check_branch
      %24 = sbr.rel (0) target = $region9
    $region8: #{tpu_custom_call.1} parent=1 // pred_region
      %s26 = ssub.s32 16, 16
      %27 = vsyncadd [#allocation5], %s26
      %s29 = sshll.u32 %s1, 4
      %s30 = int_to_ptr.vmem [resolvable:$true] %s29
      %32 = dma.vmem_to_smem %s30, 16, [#allocation4], [#allocation5]
    $region9: #{tpu_custom_call.1} parent=1 // pred_fallthru
      _
    // Predicated region
    $region10: #{tpu_custom_call.1} parent=1 // pred_check
      _
    $region11: #{tpu_custom_call.1} parent=1 // pred_check_branch
      %34 = sbr.rel (0) target = $region13
    $region12: #{tpu_custom_call.1} parent=1 // pred_region
      %s36 = ssub.s32 32, 32
      %37 = vsyncadd [#allocation5], %s36
      %s39 = sshll.u32 %s2, 4
      %s40 = int_to_ptr.vmem [resolvable:$true] %s39
      %42 = dma.vmem_to_smem %s40, 32, [#allocation6], [#allocation5]
    $region13: #{tpu_custom_call.1} parent=1 // pred_fallthru
      _
    // Predicated region
    $region14: #{tpu_custom_call.1} parent=1 // pred_check
      _
    $region15: #{tpu_custom_call.1} parent=1 // pred_check_branch
      %44 = sbr.rel (0) target = $region17
    $region16: #{tpu_custom_call.1} parent=1 // pred_region
      %s46 = ssub.s32 16, 16
      %47 = vsyncadd [#allocation8], %s46
      %s49 = sshll.u32 %s3, 4
      %s50 = int_to_ptr.vmem [resolvable:$true] %s49
      %52 = dma.vmem_to_smem %s50, 16, [#allocation7], [#allocation8]
    $region17: #{tpu_custom_call.1} parent=1 // pred_fallthru
      _
    // Predicated region
    $region18: #{tpu_custom_call.1} parent=1 // pred_check
      _
    $region19: #{tpu_custom_call.1} parent=1 // pred_check_branch
      %54 = sbr.rel (0) target = $region21
    $region20: #{tpu_custom_call.1} parent=1 // pred_region
      _
    $region21: #{tpu_custom_call.1} parent=1 // pred_fallthru
      _
    // Predicated region
    $region22: #{tpu_custom_call.1} parent=1 // pred_check
      _
    $region23: #{tpu_custom_call.1} parent=1 // pred_check_branch
      %56 = sbr.rel (0) target = $region25
    $region24: #{tpu_custom_call.1} parent=1 // pred_region
      %57 = dma.done [#allocation3], 64
    $region25: #{tpu_custom_call.1} parent=1 // pred_fallthru
      _
    // Predicated region
    $region26: #{tpu_custom_call.1} parent=1 // pred_check
      _
    $region27: #{tpu_custom_call.1} parent=1 // pred_check_branch
      %59 = sbr.rel (0) target = $region29
    $region28: #{tpu_custom_call.1} parent=1 // pred_region
      %60 = dma.done [#allocation5], 16
    $region29: #{tpu_custom_call.1} parent=1 // pred_fallthru
      _
    // Predicated region
    $region30: #{tpu_custom_call.1} parent=1 // pred_check
      _
    $region31: #{tpu_custom_call.1} parent=1 // pred_check_branch
      %62 = sbr.rel (0) target = $region33
    $region32: #{tpu_custom_call.1} parent=1 // pred_region
      %63 = dma.done [#allocation5], 32
    $region33: #{tpu_custom_call.1} parent=1 // pred_fallthru
      _
    // Predicated region
    $region34: #{tpu_custom_call.1} parent=1 // pred_check
      _
    $region35: #{tpu_custom_call.1} parent=1 // pred_check_branch
      %65 = sbr.rel (0) target = $region37
    $region36: #{tpu_custom_call.1} parent=1 // pred_region
      %66 = dma.done [#allocation8], 16
    $region37: #{tpu_custom_call.1} parent=1 // pred_fallthru
      _
    %67 = sfence
    %s68 = sld [smem:[#allocation2]]
    %v69 = vld [vmem:[%s4] sm:$0xff]
    %v70 = vstv %s68
    %v71 = vmul.f32 %v70, %v69
    %s72 = sld [smem:[#allocation4]]
    %v73 = vstv %s72
    %v74 = vadd.f32 %v71, %v73
    %s75 = sld [smem:[#allocation2 + $0x1]]
    %s76 = scalar_lea.vmem %s4, 8
    %v77 = vld [vmem:[%s76] sm:$0xff]
    %v78 = vstv %s75
    %v79 = vmul.f32 %v78, %v77
    %v80 = vadd.f32 %v74, %v79
    %s81 = sld [smem:[#allocation2 + $0x2]]
    %s82 = scalar_lea.vmem %s4, 16
    %v83 = vld [vmem:[%s82] sm:$0xff]
    %v84 = vstv %s81
    %v85 = vmul.f32 %v84, %v83
    %v86 = vadd.f32 %v80, %v85
    %s87 = sld [smem:[#allocation2 + $0x3]]
    %s88 = scalar_lea.vmem %s4, 24
    %v89 = vld [vmem:[%s88] sm:$0xff]
    %v90 = vstv %s87
    %v91 = vmul.f32 %v90, %v89
    %v92 = vadd.f32 %v86, %v91
    %s93 = sld [smem:[#allocation2 + $0x4]]
    %s94 = scalar_lea.vmem %s4, 32
    %v95 = vld [vmem:[%s94] sm:$0xff]
    %v96 = vstv %s93
    %v97 = vmul.f32 %v96, %v95
    %v98 = vadd.f32 %v92, %v97
    %s99 = sld [smem:[#allocation2 + $0x5]]
    %s100 = scalar_lea.vmem %s4, 40
    %v101 = vld [vmem:[%s100] sm:$0xff]
    %v102 = vstv %s99
    %v103 = vmul.f32 %v102, %v101
    %v104 = vadd.f32 %v98, %v103
    %s105 = sld [smem:[#allocation2 + $0x6]]
    %s106 = scalar_lea.vmem %s4, 48
    %v107 = vld [vmem:[%s106] sm:$0xff]
    %v108 = vstv %s105
    %v109 = vmul.f32 %v108, %v107
    %v110 = vadd.f32 %v104, %v109
    %v111 = vmax.f32 %v110, 0.0
    %s112 = sld [smem:[#allocation2 + $0x80]]
    %v113 = vstv %s112
    %v114 = vmul.f32 %v113, %v69
    %s115 = sld [smem:[#allocation4 + $0x1]]
    %v116 = vstv %s115
    %v117 = vadd.f32 %v114, %v116
    %s118 = sld [smem:[#allocation2 + $0x81]]
    %v119 = vstv %s118
    %v120 = vmul.f32 %v119, %v77
    %v121 = vadd.f32 %v117, %v120
    %s122 = sld [smem:[#allocation2 + $0x82]]
    %v123 = vstv %s122
    %v124 = vmul.f32 %v123, %v83
    %v125 = vadd.f32 %v121, %v124
    %s126 = sld [smem:[#allocation2 + $0x83]]
    %v127 = vstv %s126
    %v128 = vmul.f32 %v127, %v89
    %v129 = vadd.f32 %v125, %v128
    %s130 = sld [smem:[#allocation2 + $0x84]]
    %v131 = vstv %s130
    %v132 = vmul.f32 %v131, %v95
    %v133 = vadd.f32 %v129, %v132
    %s134 = sld [smem:[#allocation2 + $0x85]]
    %v135 = vstv %s134
    %v136 = vmul.f32 %v135, %v101
    %v137 = vadd.f32 %v133, %v136
    %s138 = sld [smem:[#allocation2 + $0x86]]
    %v139 = vstv %s138
    %v140 = vmul.f32 %v139, %v107
    %v141 = vadd.f32 %v137, %v140
    %v142 = vmax.f32 %v141, 0.0
    %s143 = sld [smem:[#allocation2 + $0x100]]
    %v144 = vstv %s143
    %v145 = vmul.f32 %v144, %v69
    %s146 = sld [smem:[#allocation4 + $0x2]]
    %v147 = vstv %s146
    %v148 = vadd.f32 %v145, %v147
    %s149 = sld [smem:[#allocation2 + $0x101]]
    %v150 = vstv %s149
    %v151 = vmul.f32 %v150, %v77
    %v152 = vadd.f32 %v148, %v151
    %s153 = sld [smem:[#allocation2 + $0x102]]
    %v154 = vstv %s153
    %v155 = vmul.f32 %v154, %v83
    %v156 = vadd.f32 %v152, %v155
    %s157 = sld [smem:[#allocation2 + $0x103]]
    %v158 = vstv %s157
    %v159 = vmul.f32 %v158, %v89
    %v160 = vadd.f32 %v156, %v159
    %s161 = sld [smem:[#allocation2 + $0x104]]
    %v162 = vstv %s161
    %v163 = vmul.f32 %v162, %v95
    %v164 = vadd.f32 %v160, %v163
    %s165 = sld [smem:[#allocation2 + $0x105]]
    %v166 = vstv %s165
    %v167 = vmul.f32 %v166, %v101
    %v168 = vadd.f32 %v164, %v167
    %s169 = sld [smem:[#allocation2 + $0x106]]
    %v170 = vstv %s169
    %v171 = vmul.f32 %v170, %v107
    %v172 = vadd.f32 %v168, %v171
    %v173 = vmax.f32 %v172, 0.0
    %s174 = sld [smem:[#allocation7]]
    %s175 = sld [smem:[#allocation6]]
    %v176 = vstv %s175
    %v177 = vmul.f32 %v176, %v111
    %v178 = vstv %s174
    %v179 = vadd.f32 %v178, %v177
    %s180 = sld [smem:[#allocation7 + $0x1]]
    %s181 = sld [smem:[#allocation6 + $0x80]]
    %v182 = vstv %s181
    %v183 = vmul.f32 %v182, %v111
    %v184 = vstv %s180
    %v185 = vadd.f32 %v184, %v183
    %s186 = sld [smem:[#allocation6 + $0x1]]
    %v187 = vstv %s186
    %v188 = vmul.f32 %v187, %v142
    %v189 = vadd.f32 %v179, %v188
    %s190 = sld [smem:[#allocation6 + $0x81]]
    %v191 = vstv %s190
    %v192 = vmul.f32 %v191, %v142
    %v193 = vadd.f32 %v185, %v192
    %s194 = sld [smem:[#allocation6 + $0x2]]
    %v195 = vstv %s194
    %v196 = vmul.f32 %v195, %v173
    %v197 = vadd.f32 %v189, %v196
    %s198 = sld [smem:[#allocation6 + $0x82]]
    %v199 = vstv %s198
    %v200 = vmul.f32 %v199, %v173
    %v201 = vadd.f32 %v193, %v200
    %v202 = vsub.f32 %v201, %v197
    %v203 = vand.u32 2147483647, %v202
    %v204 = vsub.f32 0.0, %v203
    %v205 = vmul.f32 %v204, 1.442695
    %v206 = vpow.pop %v205
    %v207 = vadd.f32 %v206, 1.0
    %v208 = vrcp.pop %v207
    %v209 = vmul.f32 1.0, %v208
    %v210 = vmul.f32 %v206, %v209
    %vm211 = vcmp.ge.f32.partialorder %v202, 0.0
    %v212 = vsel %vm211, %v210, %v209
    %vm213 = vcmask 7168
    %214 = vst.msk [vmem:[%s5] sm:$0xff] %vm213, %v212
    %v215 = vsel %vm211, %v209, %v210
    %s216 = scalar_lea.vmem %s5, 8
    %217 = vst.msk [vmem:[%s216] sm:$0xff] %vm213, %v215
    // Predicated region
    $region38: #{tpu_custom_call.1} parent=1 // pred_check
      _
    $region39: #{tpu_custom_call.1} parent=1 // pred_check_branch
      %219 = sbr.rel (0) target = $region41
    $region40: #{tpu_custom_call.1} parent=1 // pred_region
      _
    $region41: #{tpu_custom_call.1} parent=1 // pred_fallthru
      _
    // Predicated region
    $region42: #{tpu_custom_call.1} parent=1 // pred_check
      _
    $region43: #{tpu_custom_call.1} parent=1 // pred_check_branch
      %221 = sbr.rel (0) target = $region45
    $region44: #{tpu_custom_call.1} parent=1 // pred_region
      _
    $region45: #{tpu_custom_call.1} parent=1 // pred_fallthru
      _
    %222 = vsyncpa [#allocation3], 1
    %223 = vsyncpa [#allocation5], 1
    %224 = vsyncpa [#allocation8], 1

</llo_original>
